<compile_context>
chip_gen: v7x
topology: tpu7x:2x2x1
jax: 0.10.0
libtpu: 0.0.40
codegen_flags: <defaults>
</compile_context>

<pallas_src>
import jax
import jax.numpy as jnp
from jax.experimental import pallas as pl
from jax.experimental.pallas import tpu as pltpu


# Lane widths tried, widest first: wider unmasked vst is better, but any
# multiple of 128 keeps all lanes busy.
_LANE_CHOICES = (2048, 1024, 512, 256, 128)

# Below this element count the fixed pallas_call overhead is not worth it and
# a fused XLA multiply wins.  Kept small so the demo below exercises the
# kernel at module-sized tensors; raise for production if desired.
_MIN_PALLAS_ELEMS = 2048


def _round_up(x, m):
    return ((x + m - 1) // m) * m


def _pick_lanes(total):
    for lanes in _LANE_CHOICES:
        if total % lanes == 0:
            return lanes
    return None


def _device_tile_budget():
    """(bytes per pipeline buffer, vmem_limit_bytes or None), per generation."""
    kind = ""
    try:
        kind = jax.devices()[0].device_kind.lower()
    except Exception:
        pass
    if "v7" in kind or "7x" in kind:
        # v7x: ~3.2 TB/s HBM -> larger tiles amortize the ~0.35 us/step grid
        # overhead.  8 MiB/buffer x 4 buffers = 32 MiB sits at the 32 MiB
        # scoped default, so raise the limit explicitly (64 MiB physical).
        return 8 << 20, 48 << 20
    if "v6" in kind:
        # 4 MiB/buffer x 4 = 16 MiB, inside v6e's 32 MiB scoped default.
        return 4 << 20, None
    # v5e / older / unknown: 2 MiB/buffer x 4 = 8 MiB, inside the 16 MiB default.
    return 2 << 20, None


def _reverse_kernel(lam_ref, g_ref, o_ref):
    # lam_ref: (1,) float32 in SMEM (runtime value -> no recompile when lambda
    # is annealed).  One VPU multiply per vreg; HBM-bandwidth bound.
    neg_lam = -lam_ref[0]
    o_ref[...] = (g_ref[...] * neg_lam).astype(o_ref.dtype)


def _reverse_pallas(g, lam, lanes):
    """-lam * g via a tiled, lane-dense, auto-pipelined Pallas kernel.

    Requires g.size % lanes == 0, so the (rows, lanes) reshape in and the
    reshape back are metadata-only (no pad / slice HBM passes).
    """
    orig_shape = g.shape
    total = g.size
    rows = total // lanes
    g2d = g.reshape(rows, lanes)

    itemsize = jnp.dtype(g.dtype).itemsize
    # Native sublane count: 8 for 4-byte, 16 for 2-byte, 32 for 1-byte dtypes.
    sublane = max(8, 32 // max(itemsize, 1))

    per_buf_bytes, vmem_limit = _device_tile_budget()
    cap = max(per_buf_bytes // (lanes * itemsize), sublane)
    cap -= cap % sublane

    if rows <= cap:
        if rows >= 2 * sublane:
            # Force >= 2 grid steps so a 2-TensorCore chip (v7x) can shard
            # the "parallel" grid axis across both cores.
            tm = min(cap, _round_up(pl.cdiv(rows, 2), sublane))
        else:
            tm = rows                      # single block == full array dims
    else:
        tm = cap
    num_blocks = pl.cdiv(rows, tm)          # ragged final block is masked

    lam_arr = jnp.reshape(lam.astype(jnp.float32), (1,))

    out2d = pl.pallas_call(
        _reverse_kernel,
        out_shape=jax.ShapeDtypeStruct((rows, lanes), g.dtype),
        grid=(num_blocks,),
        in_specs=[
            pl.BlockSpec(memory_space=pltpu.MemorySpace.SMEM),   # lambda scalar
            pl.BlockSpec((tm, lanes), lambda i: (i, 0)),         # cotangent tile
        ],
        out_specs=pl.BlockSpec((tm, lanes), lambda i: (i, 0)),
        # Elementwise scale is in-place safe: alias the cotangent buffer to the
        # output (input index 1; index 0 is the SMEM scalar).
        input_output_aliases={1: 0},
        compiler_params=pltpu.CompilerParams(
            dimension_semantics=("parallel",),
            vmem_limit_bytes=vmem_limit),
    )(lam_arr, g2d)

    return out2d.reshape(orig_shape)


def _reverse_scaled(g, lam):
    """dx = -lam * g, dispatching between the Pallas kernel and fused XLA."""
    total = g.size
    lanes = _pick_lanes(total)
    if lanes is None or total < _MIN_PALLAS_ELEMS:
        # Not lane-divisible (would need pad + slice = extra full HBM passes)
        # or tiny: let XLA fuse the scale into the producer of g.
        return (g * (-lam)).astype(g.dtype)
    return _reverse_pallas(g, lam, lanes)


# ----------------------------- custom VJP -----------------------------------

@jax.custom_vjp
def _gradient_reversal(x, lam):
    # Forward: identity (PyTorch's clone is unnecessary for immutable arrays).
    return x


def _gr_fwd(x, lam):
    return x, lam


def _gr_bwd(lam, g):
    # Mirrors PyTorch: dx = -lambda * grads; lambda gets a zero cotangent
    # (the PyTorch backward returns None for it).
    return _reverse_scaled(g, lam), jnp.zeros_like(lam)


_gradient_reversal.defvjp(_gr_fwd, _gr_bwd)


def gradient_reversal(x, lambda_=1.0):
    """Identity forward; multiplies incoming gradients by -lambda_ in backward.

    lambda_ may be a Python number or a traced JAX scalar; annealed schedules
    do not trigger recompilation (lambda is read from SMEM at runtime).
    """
    lam = jnp.asarray(lambda_, dtype=jnp.float32)
    return _gradient_reversal(x, lam)


class GradientReversal:
    """JAX/Pallas equivalent of the PyTorch GradientReversal module."""

    def __init__(self, lambda_=1):
        self.lambda_ = lambda_

    def __call__(self, x):
        return gradient_reversal(x, self.lambda_)


# ------------------------------- main ---------------------------------------

if __name__ == "__main__":
    key = jax.random.PRNGKey(0)
    k0, k1, k2, k3 = jax.random.split(key, 4)

    # --- module-shaped test: NCHW (2, 4, 16, 16) -----------------------------
    x = jax.random.normal(k0, (2, 4, 16, 16), dtype=jnp.float32)
    mod = GradientReversal(lambda_=1)

    y = jax.block_until_ready(mod(x))
    assert y.shape == x.shape and y.dtype == x.dtype
    assert jnp.array_equal(y, x), "forward is not identity"

    g = jax.block_until_ready(jax.grad(lambda inp: jnp.sum(mod(inp)))(x))
    assert jnp.allclose(g, -jnp.ones_like(x)), "backward reversal wrong"

    # --- annealed lambda through ONE jitted callable (no per-value retrace) --
    ct = jax.random.normal(k1, x.shape, dtype=jnp.float32)

    @jax.jit
    def reversed_grad(inp, lam, cot):
        _, vjp_fn = jax.vjp(lambda a: gradient_reversal(a, lam), inp)
        return vjp_fn(cot)[0]

    for lam in (0.5, 1.7):
        dx = jax.block_until_ready(reversed_grad(x, lam, ct))
        assert jnp.allclose(dx, -lam * ct, atol=1e-6), f"vjp scale wrong ({lam})"

    # --- multi-block grid with ragged (masked) final block, f32 --------------
    xb = jax.random.normal(k2, (34, 32, 32), dtype=jnp.float32)   # rows=17
    ctb = jax.random.normal(k3, xb.shape, dtype=jnp.float32)
    _, vjp_fn = jax.vjp(lambda a: gradient_reversal(a, 0.25), xb)
    dxb = jax.block_until_ready(vjp_fn(ctb)[0])
    assert jnp.allclose(dxb, -0.25 * ctb, atol=1e-6), "ragged-grid vjp wrong"

    # --- bf16 path (16-row sublane tiling, 2 parallel blocks) ----------------
    xh = jax.random.normal(k2, (16, 4, 32, 32), dtype=jnp.bfloat16)
    cth = jax.random.normal(k3, xh.shape, dtype=jnp.bfloat16)
    _, vjp_fn = jax.vjp(lambda a: gradient_reversal(a, 2.0), xh)
    dxh = jax.block_until_ready(vjp_fn(cth)[0])
    assert dxh.dtype == jnp.bfloat16
    assert jnp.allclose(dxh.astype(jnp.float32),
                        -2.0 * cth.astype(jnp.float32),
                        rtol=2e-2, atol=1e-2), "bf16 vjp wrong"

    # --- non-lane-divisible shape -> fused XLA fallback -----------------------
    xf = jax.random.normal(k1, (3, 5, 7), dtype=jnp.float32)
    gf = jax.block_until_ready(
        jax.grad(lambda a: jnp.sum(gradient_reversal(a, 3.0)))(xf))
    assert jnp.allclose(gf, -3.0 * jnp.ones_like(xf), atol=1e-6), "fallback wrong"

    print("KERNEL_OK")
</pallas_src>

<mosaic_0001>
module attributes {stable_mosaic.version = 11 : i64} {
  func.func @_reverse_kernel(%arg0: i32, %arg1: memref<1xf32, #tpu.memory_space<smem>>, %arg2: memref<1x2048xf32, #tpu.memory_space<vmem>>, %arg3: memref<1x2048xf32, #tpu.memory_space<vmem>>) attributes {dimension_semantics = [#tpu.dimension_semantics<parallel>], iteration_bounds = array<i64: 1>, scalar_prefetch = 0 : i64, scratch_operands = 0 : i64, tpu.core_type = #tpu.core_type<tc>, window_params = [{transform_indices = @transform_0, window_bounds = array<i64: 1>}, {transform_indices = @transform_1, window_bounds = array<i64: 1, 2048>}, {transform_indices = @transform_2, window_bounds = array<i64: 1, 2048>}]} {
    %c0 = arith.constant 0 : index
    %0 = memref.load %arg1[%c0] : memref<1xf32, #tpu.memory_space<smem>>
    %cst = arith.constant 0.000000e+00 : f32
    %1 = arith.subf %cst, %0 : f32
    %c0_0 = arith.constant 0 : index
    %c0_1 = arith.constant 0 : index
    %2 = vector.load %arg2[%c0_0, %c0_1] : memref<1x2048xf32, #tpu.memory_space<vmem>>, vector<1x2048xf32>
    %3 = vector.broadcast %1 : f32 to vector<1x2048xf32>
    %4 = arith.mulf %2, %3 : vector<1x2048xf32>
    %c0_2 = arith.constant 0 : index
    %c0_3 = arith.constant 0 : index
    %5 = vector.load %arg3[%c0_2, %c0_3] : memref<1x2048xf32, #tpu.memory_space<vmem>>, vector<1x2048xf32>
    tpu.vector_store %arg3[%c0_2, %c0_3], %4 {strides = array<i32>} : memref<1x2048xf32, #tpu.memory_space<vmem>>, vector<1x2048xf32>,
    return
  }
  func.func @transform_0(%arg0: i32) -> i32 {
    %c0_i32 = arith.constant 0 : i32
    %c0_i32_0 = arith.constant 0 : i32
    return %c0_i32 : i32
  }
  func.func @transform_1(%arg0: i32) -> (i32, i32) {
    %c0_i32 = arith.constant 0 : i32
    %c0_i32_0 = arith.constant 0 : i32
    return %arg0, %c0_i32 : i32, i32
  }
  func.func @transform_2(%arg0: i32) -> (i32, i32) {
    %c0_i32 = arith.constant 0 : i32
    %c0_i32_0 = arith.constant 0 : i32
    return %arg0, %c0_i32 : i32, i32
  }
}

</mosaic_0001>

<llo_original>
// kernel: tpu_custom_call.1
$region0: #{tpu_custom_call.1}
  #allocation0 [shape = 'u32[]', space=smem, size = 0x4, offset = 0x4, fixed_abs, tag = 'smem constant byte address 0x4 - core index']
  #allocation1 [shape = 'u32[144,128]{1,0:T(1,128)}', space=vmem, size = 0x12000, scoped, tag = 'internal scratch']
  #allocation2 [shape = 'f32[1]{0:T(128)S(6)}', space=smem, size = 0x200, scoped, tag = 'scoped memory for tpu_custom_call.1']
  %s0 = inlined_call_operand.<no memory space> [shape: f32[1], index: 0, kind: input, shape index: {}]
  %s1 = inlined_call_operand.hbm [shape: f32[1,2048], index: 1, kind: input, shape index: {}, may-alias: {1,2}]
  %s2 = inlined_call_operand.hbm [shape: f32[1,2048], index: 2, kind: output, shape index: {}, may-alias: {1,2}]
  %s3 = sld [smem:[#allocation0]]
  $region22: #{tpu_custom_call.1} parent=0
    _
  %s5 = ssub.s32 1, %s3
  %s6 = scalar_select 0, %s5, %s3
  %7 = sst [smem:[#allocation2]] %s0
  $region1: #{tpu_custom_call.1} parent=0
    #allocation3 [shape = 'u8[8192]{0}', space=vmem, size = 0x2000, scoped, tag = 'input window, operand 1, single buffered']
    #allocation4 [shape = 's32[1]{0}', space=sflag, size = 0x4, scoped, tag = 'scoped memory for tpu_custom_call.1']
    #allocation5 [shape = 's32[1]{0}', space=sflag, size = 0x4, scoped, tag = 'scoped memory for tpu_custom_call.1']
    #allocation6 [shape = 'u8[8192]{0}', space=vmem, size = 0x2000, scoped, tag = 'output window, operand 0, single buffered']
    %8 = vsyncpa [#allocation4], 0
    %9 = vsyncpa [#allocation5], 0
    // Predicated region
    $region2: #{tpu_custom_call.1} parent=1 // pred_check
      _
    $region3: #{tpu_custom_call.1} parent=1 // pred_check_branch
      %11 = sbr.rel (0) target = $region5
    $region4: #{tpu_custom_call.1} parent=1 // pred_region
      _
    $region5: #{tpu_custom_call.1} parent=1 // pred_fallthru
      _
    // Predicated region
    $region6: #{tpu_custom_call.1} parent=1 // pred_check
      _
    $region7: #{tpu_custom_call.1} parent=1 // pred_check_branch
      %13 = sbr.rel (0) target = $region9
    $region8: #{tpu_custom_call.1} parent=1 // pred_region
      %s15 = ssub.s32 256, 256
      %16 = vsyncadd [#allocation4], %s15
      %s18 = sshll.u32 [#allocation3], 4
      %s19 = int_to_ptr.vmem [resolvable:$true] %s18
      %21 = dma.hbm_to_vmem [thread:$0]  %s1, 256, %s19, [#allocation4]
    $region9: #{tpu_custom_call.1} parent=1 // pred_fallthru
      _
    // Predicated region
    $region10: #{tpu_custom_call.1} parent=1 // pred_check
      _
    $region11: #{tpu_custom_call.1} parent=1 // pred_check_branch
      %23 = sbr.rel (0) target = $region13
    $region12: #{tpu_custom_call.1} parent=1 // pred_region
      %24 = dma.done [#allocation4], 256
    $region13: #{tpu_custom_call.1} parent=1 // pred_fallthru
      _
    %s25 = sld [smem:[#allocation2]]
    %s26 = ssub.f32 0.0, %s25
    %v27 = vld [vmem:[#allocation3] sm:$0xff]
    %v28 = vld [vmem:[#allocation3 + $0x8] sm:$0xff]
    %v29 = vstv %s26
    %v30 = vmul.f32 %v27, %v29
    %v31 = vmul.f32 %v28, %v29
    %32 = vst [vmem:[#allocation6] sm:$0xff] %v30
    %33 = vst [vmem:[#allocation6 + $0x8] sm:$0xff] %v31
    // Predicated region
    $region14: #{tpu_custom_call.1} parent=1 // pred_check
      _
    $region15: #{tpu_custom_call.1} parent=1 // pred_check_branch
      %35 = sbr.rel (0) target = $region17
    $region16: #{tpu_custom_call.1} parent=1 // pred_region
      %s37 = ssub.s32 256, 256
      %38 = vsyncadd [#allocation5], %s37
      %s40 = sshll.u32 [#allocation6], 4
      %s41 = int_to_ptr.vmem [resolvable:$true] %s40
      %43 = dma.vmem_to_hbm [thread:$0]  %s41, 256, %s2, [#allocation5]
    $region17: #{tpu_custom_call.1} parent=1 // pred_fallthru
      _
    // Predicated region
    $region18: #{tpu_custom_call.1} parent=1 // pred_check
      _
    $region19: #{tpu_custom_call.1} parent=1 // pred_check_branch
      %45 = sbr.rel (0) target = $region21
    $region20: #{tpu_custom_call.1} parent=1 // pred_region
      %46 = dma.done [#allocation5], 256
    $region21: #{tpu_custom_call.1} parent=1 // pred_fallthru
      _
    %47 = vsyncpa [#allocation4], 1
    %48 = vsyncpa [#allocation5], 1

</llo_original>
